<compile_context>
chip_gen: v5e
topology: v5e:2x2
jax: 0.10.0
libtpu: 0.0.40
codegen_flags: <defaults>
</compile_context>

<pallas_src>
import functools

import jax
import jax.numpy as jnp
import numpy as np
from jax.experimental import pallas as pl
from jax.experimental.pallas import tpu as pltpu

_NEG_INF = -1e30


def _round_up(x, m):
    return (x + m - 1) // m * m


def _vmem_capacity_bytes():
    try:
        return int(pltpu.get_tpu_info().vmem_capacity_bytes)
    except Exception:
        return 128 << 20  # conservative v5e/v6e default


def _vmem_limit(bytes_estimate, capacity):
    # 2x headroom over the static block estimate, clamped to 3/4 of physical
    # VMEM (=> <=48 MiB on v7x's 64 MiB, up to 96 MiB on v5e/v6e's 128 MiB).
    return int(min(max(2 * bytes_estimate + (8 << 20), 32 << 20),
                   (capacity * 3) // 4))


# ---------------------------------------------------------------------------
# Pass 1: streaming k/v path (per-core partial reduction).
#   k|v = kv @ [Wk|Wv] + [bk|bv]       (one fused bf16 matmul, f32 accumulate)
#   online column softmax kept per sublane stream:
#       m,l,acc : [8, E]   (VPU-only updates in the loop)
#   finalize: merge 8 streams once -> per-core (m, l, acc) partial [1, 3, E]
# ---------------------------------------------------------------------------
def _context_kernel(kv_ref, wkv_ref, bkv_ref, part_ref, m_sc, l_sc, acc_sc, *,
                    e, tile_kv, nk_valid, blocks_per_split, mask_rows):
    c = pl.program_id(0)
    j = pl.program_id(1)

    @pl.when(j == 0)
    def _init():
        m_sc[...] = jnp.full_like(m_sc, _NEG_INF)
        l_sc[...] = jnp.zeros_like(l_sc)
        acc_sc[...] = jnp.zeros_like(acc_sc)

    # Fused k|v projection on the bf16 MXU path, f32 accumulation + f32 bias.
    kv = jnp.dot(kv_ref[...].astype(jnp.bfloat16), wkv_ref[...],
                 preferred_element_type=jnp.float32) + bkv_ref[...]
    k = kv[:, :e]
    v = kv[:, e:]

    if mask_rows:  # static flag: only emitted when ragged/duplicate blocks exist
        base = (c * blocks_per_split + j) * tile_kv
        rows = base + jax.lax.broadcasted_iota(jnp.int32, (tile_kv, 1), 0)
        valid = rows < nk_valid
        # Mask k BEFORE the running max (garbage would inflate m_new and wipe
        # the accumulated state via alpha underflow); zero v so zero-weight
        # garbage rows cannot contribute NaN/Inf to acc.
        k = jnp.where(valid, k, _NEG_INF)
        v = jnp.where(valid, v, 0.0)

    # Per-sublane-stream online column softmax: all reductions below are over
    # the leading (vreg-group) axis -> pure VPU; no XLU in the inner loop.
    g = tile_kv // 8
    kr = k.reshape(g, 8, e)
    vr = v.reshape(g, 8, e)

    m_prev = m_sc[...]
    m_new = jnp.maximum(m_prev, jnp.max(kr, axis=0))          # [8, e]
    alpha = jnp.exp(m_prev - m_new)
    p = jnp.exp(kr - m_new[None, :, :])                       # [g, 8, e]
    l_sc[...] = alpha * l_sc[...] + jnp.sum(p, axis=0)
    acc_sc[...] = alpha * acc_sc[...] + jnp.sum(p * vr, axis=0)
    m_sc[...] = m_new

    @pl.when(j == pl.num_programs(1) - 1)
    def _finalize():
        # Single cross-sublane merge of the 8 running streams.
        m_c = jnp.max(m_sc[...], axis=0, keepdims=True)           # [1, e]
        corr = jnp.exp(m_sc[...] - m_c)                           # [8, e]
        l_c = jnp.sum(corr * l_sc[...], axis=0, keepdims=True)
        acc_c = jnp.sum(corr * acc_sc[...], axis=0, keepdims=True)
        part_ref[...] = jnp.concatenate(
            [m_c, l_c, acc_c], axis=0)[None].astype(part_ref.dtype)


# ---------------------------------------------------------------------------
# Pass 2: q path.  1/sqrt(E) scale is pre-folded into Wq / bq.
#   out = softmax_rows(q @ (Wq*s) + bq*s) * context
# ---------------------------------------------------------------------------
def _query_kernel(q_ref, wq_ref, bq_ref, ctx_ref, out_ref):
    q = jnp.dot(q_ref[...].astype(jnp.bfloat16), wq_ref[...],
                preferred_element_type=jnp.float32) + bq_ref[...]
    q = jnp.exp(q - jnp.max(q, axis=-1, keepdims=True))
    inv = pl.reciprocal(jnp.sum(q, axis=-1, keepdims=True), approx=True)
    out_ref[...] = (q * ctx_ref[...] * inv).astype(out_ref.dtype)


def linear_attention(query, key_value, wq_t, bq, wk_t, bk, wv_t, bv, emb_dim,
                     *, tile_q=None, tile_kv=None):
    """query: [Nq, E], key_value: [Nk, E]; weights pre-transposed [in, out];
    biases [1, E].  Matches the PyTorch module (k-softmax over ALL rows)."""
    Nq, E = query.shape
    Nk, _ = key_value.shape
    scale = float(emb_dim) ** (-0.5)
    f32 = jnp.float32
    bf16 = jnp.bfloat16
    out_dtype = query.dtype

    cap = _vmem_capacity_bytes()
    default_tile = 1024 if cap >= (100 << 20) else 512   # v5e/v6e vs v7x budget
    tile_q = default_tile if tile_q is None else tile_q
    tile_kv = default_tile if tile_kv is None else tile_kv
    tile_q = max(8, min(_round_up(tile_q, 8), _round_up(Nq, 8)))
    tile_kv = max(8, min(_round_up(tile_kv, 8), _round_up(Nk, 8)))

    # Fold scale into the q projection; bf16 weights (MXU path), f32 biases.
    wq_bf = (wq_t.astype(f32) * scale).astype(bf16)               # [E, E]
    bq_s = bq.astype(f32) * scale                                 # [1, E]
    wkv_bf = jnp.concatenate([wk_t, wv_t], axis=1).astype(bf16)   # [E, 2E]
    bkv = jnp.concatenate([bk, bv], axis=1).astype(f32)           # [1, 2E]

    itemsize_in = query.dtype.itemsize

    # ----- pass 1: per-core partial (m, l, acc) over the streamed kv rows ----
    nblk = pl.cdiv(Nk, tile_kv)
    num_splits = 2 if nblk >= 2 else 1     # 2-TC split on v7x; harmless elsewhere
    bps = pl.cdiv(nblk, num_splits)        # blocks per split
    mask_rows = (num_splits * bps * tile_kv) != Nk

    bytes1 = (2 * tile_kv * E * itemsize_in        # streamed kv tile (x2 buffers)
              + 2 * E * 2 * E * 2                  # resident Wk|Wv (bf16, x2)
              + 2 * 2 * E * 4 + 2 * 3 * E * 4      # bias + partial output
              + 3 * 8 * E * 4                      # scratch m/l/acc
              + 4 * tile_kv * 2 * E * 4)           # matmul / exp temporaries

    part = pl.pallas_call(
        functools.partial(_context_kernel, e=E, tile_kv=tile_kv, nk_valid=Nk,
                          blocks_per_split=bps, mask_rows=mask_rows),
        out_shape=jax.ShapeDtypeStruct((num_splits, 3, E), f32),
        grid=(num_splits, bps),
        in_specs=[
            # Streamed kv rows; duplicate (clamped) blocks are fully masked
            # in-kernel, so the clamp is purely an OOB-DMA guard.
            pl.BlockSpec((tile_kv, E),
                         lambda c, j: (jnp.minimum(c * bps + j, nblk - 1), 0)),
            pl.BlockSpec((E, 2 * E), lambda c, j: (0, 0)),     # resident Wk|Wv
            pl.BlockSpec((1, 2 * E), lambda c, j: (0, 0)),     # resident bk|bv
        ],
        out_specs=pl.BlockSpec((1, 3, E), lambda c, j: (c, 0, 0)),
        scratch_shapes=[pltpu.VMEM((8, E), f32)] * 3,          # m, l, acc
        compiler_params=pltpu.CompilerParams(
            dimension_semantics=("parallel", "arbitrary"),
            vmem_limit_bytes=_vmem_limit(bytes1, cap)),
    )(key_value, wkv_bf, bkv)

    # Tiny exact merge of the per-core partials ([S, 3, E]).  Exact division
    # here (correctness feedback); the approximate reciprocal is only used in
    # the per-row pass-2 softmax.
    m_p, l_p, a_p = part[:, 0, :], part[:, 1, :], part[:, 2, :]
    m_all = jnp.max(m_p, axis=0, keepdims=True)
    w = jnp.exp(m_p - m_all)
    context = (jnp.sum(w * a_p, axis=0, keepdims=True) /
               jnp.sum(w * l_p, axis=0, keepdims=True)).astype(f32)   # [1, E]

    # ----- pass 2: row-parallel q softmax * context -------------------------
    q_grid = pl.cdiv(Nq, tile_q)
    bytes2 = (2 * tile_q * E * itemsize_in
              + 2 * E * E * 2 + 4 * E * 4
              + 2 * tile_q * E * out_dtype.itemsize
              + 3 * tile_q * E * 4)

    out = pl.pallas_call(
        _query_kernel,
        out_shape=jax.ShapeDtypeStruct((Nq, E), out_dtype),   # no padded write
        grid=(q_grid,),
        in_specs=[
            pl.BlockSpec((tile_q, E), lambda i: (i, 0)),       # query row tile
            pl.BlockSpec((E, E), lambda i: (0, 0)),            # resident Wq*s
            pl.BlockSpec((1, E), lambda i: (0, 0)),            # resident bq*s
            pl.BlockSpec((1, E), lambda i: (0, 0)),            # resident context
        ],
        out_specs=pl.BlockSpec((tile_q, E), lambda i: (i, 0)),
        compiler_params=pltpu.CompilerParams(
            dimension_semantics=("parallel",),                 # megacore rows
            vmem_limit_bytes=_vmem_limit(bytes2, cap)),
    )(query, wq_bf, bq_s, context)

    return out


def _reference(query, key_value, wq_t, bq, wk_t, bk, wv_t, bv, emb_dim):
    scale = float(emb_dim) ** (-0.5)
    q = (query @ wq_t + bq) * scale
    k = key_value @ wk_t + bk
    v = key_value @ wv_t + bv
    q = jax.nn.softmax(q, axis=-1)
    k = jax.nn.softmax(k, axis=0)
    context = jnp.sum(k * v, axis=0)          # [E]
    return q * context[None, :]


if __name__ == "__main__":
    # [N*B, E] queries, [HW*B, E] key/values — matches the module's flattened
    # layout.  Shapes deliberately not tile multiples so ragged blocks, the
    # 2-way core split and the clamped duplicate block are all exercised.
    N, HW, B, E = 7, 11, 2, 32
    Nq, Nk = N * B, HW * B

    key = jax.random.PRNGKey(0)
    ks = jax.random.split(key, 8)

    query = jax.random.normal(ks[0], (Nq, E), dtype=jnp.float32)
    key_value = jax.random.normal(ks[1], (Nk, E), dtype=jnp.float32)

    # nn.Linear-style deterministic init (uniform +/- 1/sqrt(E)), stored [in,out].
    bound = 1.0 / np.sqrt(E)
    wq_t = jax.random.uniform(ks[2], (E, E), jnp.float32, -bound, bound)
    wk_t = jax.random.uniform(ks[3], (E, E), jnp.float32, -bound, bound)
    wv_t = jax.random.uniform(ks[4], (E, E), jnp.float32, -bound, bound)
    bq = jax.random.uniform(ks[5], (1, E), jnp.float32, -bound, bound)
    bk = jax.random.uniform(ks[6], (1, E), jnp.float32, -bound, bound)
    bv = jax.random.uniform(ks[7], (1, E), jnp.float32, -bound, bound)

    ref = _reference(query, key_value, wq_t, bq, wk_t, bk, wv_t, bv, emb_dim=E)

    # Small tiles: multi-block kv stream + ragged trailing blocks + 2-way split.
    out_small = linear_attention(query, key_value, wq_t, bq, wk_t, bk, wv_t, bv,
                                 emb_dim=E, tile_q=8, tile_kv=8)
    # Auto (generation-aware) tiles: single-block fast path.
    out_auto = linear_attention(query, key_value, wq_t, bq, wk_t, bk, wv_t, bv,
                                emb_dim=E)
    out_small, out_auto = jax.block_until_ready((out_small, out_auto))

    # Tolerance covers bf16 matmul weights/activations plus the approximate
    # reciprocal in the pass-2 row softmax (the context division is exact).
    np.testing.assert_allclose(np.asarray(out_small), np.asarray(ref),
                               rtol=2e-2, atol=2e-3)
    np.testing.assert_allclose(np.asarray(out_auto), np.asarray(ref),
                               rtol=2e-2, atol=2e-3)

    print("KERNEL_OK")
</pallas_src>

<mosaic_0001>
module attributes {stable_mosaic.version = 11 : i64} {
  func.func @_context_kernel(%arg0: i32, %arg1: i32, %arg2: memref<8x32xf32, #tpu.memory_space<vmem>>, %arg3: memref<32x64xbf16, #tpu.memory_space<vmem>>, %arg4: memref<1x64xf32, #tpu.memory_space<vmem>>, %arg5: memref<1x3x32xf32, #tpu.memory_space<vmem>>, %arg6: memref<8x32xf32, #tpu.memory_space<vmem>>, %arg7: memref<8x32xf32, #tpu.memory_space<vmem>>, %arg8: memref<8x32xf32, #tpu.memory_space<vmem>>) attributes {dimension_semantics = [#tpu.dimension_semantics<parallel>, #tpu.dimension_semantics<arbitrary>], iteration_bounds = array<i64: 2, 2>, scalar_prefetch = 0 : i64, scratch_operands = 3 : i64, tpu.core_type = #tpu.core_type<tc>, window_params = [{transform_indices = @transform_0, window_bounds = array<i64: 8, 32>}, {pipeline_mode = #tpu.pipeline_mode<synchronous>, transform_indices = @transform_1, window_bounds = array<i64: 32, 64>}, {pipeline_mode = #tpu.pipeline_mode<synchronous>, transform_indices = @transform_2, window_bounds = array<i64: 1, 64>}, {transform_indices = @transform_3, window_bounds = array<i64: 1, 3, 32>}]} {
    %c0_i32 = arith.constant 0 : i32
    %0 = arith.cmpi eq, %arg1, %c0_i32 : i32
    %1 = arith.extui %0 : i1 to i32
    %c0_i32_0 = arith.constant 0 : i32
    %2 = arith.cmpi ne, %1, %c0_i32_0 : i32
    scf.if %2 {
      %cst_24 = arith.constant -1.000000e+30 : f32
      %53 = vector.broadcast %cst_24 : f32 to vector<8x32xf32>
      %c0_25 = arith.constant 0 : index
      %c0_26 = arith.constant 0 : index
      %54 = vector.load %arg6[%c0_25, %c0_26] : memref<8x32xf32, #tpu.memory_space<vmem>>, vector<8x32xf32>
      tpu.vector_store %arg6[%c0_25, %c0_26], %53 {strides = array<i32>} : memref<8x32xf32, #tpu.memory_space<vmem>>, vector<8x32xf32>,
      %cst_27 = arith.constant 0.000000e+00 : f32
      %55 = vector.broadcast %cst_27 : f32 to vector<8x32xf32>
      %c0_28 = arith.constant 0 : index
      %c0_29 = arith.constant 0 : index
      %56 = vector.load %arg7[%c0_28, %c0_29] : memref<8x32xf32, #tpu.memory_space<vmem>>, vector<8x32xf32>
      tpu.vector_store %arg7[%c0_28, %c0_29], %55 {strides = array<i32>} : memref<8x32xf32, #tpu.memory_space<vmem>>, vector<8x32xf32>,
      %cst_30 = arith.constant 0.000000e+00 : f32
      %57 = vector.broadcast %cst_30 : f32 to vector<8x32xf32>
      %c0_31 = arith.constant 0 : index
      %c0_32 = arith.constant 0 : index
      %58 = vector.load %arg8[%c0_31, %c0_32] : memref<8x32xf32, #tpu.memory_space<vmem>>, vector<8x32xf32>
      tpu.vector_store %arg8[%c0_31, %c0_32], %57 {strides = array<i32>} : memref<8x32xf32, #tpu.memory_space<vmem>>, vector<8x32xf32>,
    } else {
    }
    %c0 = arith.constant 0 : index
    %c0_1 = arith.constant 0 : index
    %3 = vector.load %arg2[%c0, %c0_1] : memref<8x32xf32, #tpu.memory_space<vmem>>, vector<8x32xf32>
    %4 = arith.truncf %3 : vector<8x32xf32> to vector<8x32xbf16>
    %c0_2 = arith.constant 0 : index
    %c0_3 = arith.constant 0 : index
    %5 = vector.load %arg3[%c0_2, %c0_3] : memref<32x64xbf16, #tpu.memory_space<vmem>>, vector<32x64xbf16>
    %cst = arith.constant dense<0.000000e+00> : vector<8x64xf32>
    %6 = tpu.matmul %4, %5, %cst {dimension_numbers = #tpu.dot_dimension_numbers<[1], [0], [0], [1], [0, 0, 1, 1], [], []>} : vector<8x32xbf16>, vector<32x64xbf16>, vector<8x64xf32> -> vector<8x64xf32>
    %c0_4 = arith.constant 0 : index
    %c0_5 = arith.constant 0 : index
    %7 = vector.load %arg4[%c0_4, %c0_5] : memref<1x64xf32, #tpu.memory_space<vmem>>, vector<1x64xf32>
    %8 = vector.broadcast %7 : vector<1x64xf32> to vector<8x64xf32>
    %9 = arith.addf %6, %8 : vector<8x64xf32>
    %10 = vector.extract_strided_slice %9 {offsets = [0, 0], sizes = [8, 32], strides = [1, 1]} : vector<8x64xf32> to vector<8x32xf32>
    %11 = vector.extract_strided_slice %9 {offsets = [0, 32], sizes = [8, 32], strides = [1, 1]} : vector<8x64xf32> to vector<8x32xf32>
    %c2_i32 = arith.constant 2 : i32
    %12 = arith.muli %arg0, %c2_i32 : i32
    %13 = arith.addi %12, %arg1 : i32
    %c8_i32 = arith.constant 8 : i32
    %14 = arith.muli %13, %c8_i32 : i32
    %15 = tpu.iota {dimensions = array<i32: 0>} : vector<8x1xi32>
    %16 = vector.broadcast %14 : i32 to vector<8x1xi32>
    %17 = arith.addi %16, %15 : vector<8x1xi32>
    %c22_i32 = arith.constant 22 : i32
    %18 = vector.broadcast %c22_i32 : i32 to vector<8x1xi32>
    %19 = arith.cmpi slt, %17, %18 : vector<8x1xi32>
    %cst_6 = arith.constant -1.000000e+30 : f32
    %20 = vector.shape_cast %19 : vector<8x1xi1> to vector<8x1xi1>
    %21 = vector.broadcast %20 : vector<8x1xi1> to vector<8x32xi1>
    %22 = vector.broadcast %cst_6 : f32 to vector<8x32xf32>
    %23 = arith.select %21, %10, %22 : vector<8x32xi1>, vector<8x32xf32>
    %cst_7 = arith.constant 0.000000e+00 : f32
    %24 = vector.shape_cast %19 : vector<8x1xi1> to vector<8x1xi1>
    %25 = vector.broadcast %24 : vector<8x1xi1> to vector<8x32xi1>
    %26 = vector.broadcast %cst_7 : f32 to vector<8x32xf32>
    %27 = arith.select %25, %11, %26 : vector<8x32xi1>, vector<8x32xf32>
    %28 = vector.shape_cast %23 : vector<8x32xf32> to vector<1x8x32xf32>
    %29 = vector.shape_cast %27 : vector<8x32xf32> to vector<1x8x32xf32>
    %c0_8 = arith.constant 0 : index
    %c0_9 = arith.constant 0 : index
    %30 = vector.load %arg6[%c0_8, %c0_9] : memref<8x32xf32, #tpu.memory_space<vmem>>, vector<8x32xf32>
    %cst_10 = arith.constant dense<0xFF800000> : vector<8x32xf32>
    %31 = vector.multi_reduction <maximumf>, %28, %cst_10 [0] : vector<1x8x32xf32> to vector<8x32xf32>
    %32 = arith.maximumf %30, %31 : vector<8x32xf32>
    %33 = arith.subf %30, %32 : vector<8x32xf32>
    %34 = math.exp %33 : vector<8x32xf32>
    %35 = vector.shape_cast %32 : vector<8x32xf32> to vector<1x8x32xf32>
    %36 = arith.subf %28, %35 : vector<1x8x32xf32>
    %37 = math.exp %36 : vector<1x8x32xf32>
    %c0_11 = arith.constant 0 : index
    %c0_12 = arith.constant 0 : index
    %38 = vector.load %arg7[%c0_11, %c0_12] : memref<8x32xf32, #tpu.memory_space<vmem>>, vector<8x32xf32>
    %39 = arith.mulf %34, %38 : vector<8x32xf32>
    %cst_13 = arith.constant dense<0.000000e+00> : vector<8x32xf32>
    %40 = vector.multi_reduction <add>, %37, %cst_13 [0] : vector<1x8x32xf32> to vector<8x32xf32>
    %41 = arith.addf %39, %40 : vector<8x32xf32>
    %c0_14 = arith.constant 0 : index
    %c0_15 = arith.constant 0 : index
    %42 = vector.load %arg7[%c0_14, %c0_15] : memref<8x32xf32, #tpu.memory_space<vmem>>, vector<8x32xf32>
    tpu.vector_store %arg7[%c0_14, %c0_15], %41 {strides = array<i32>} : memref<8x32xf32, #tpu.memory_space<vmem>>, vector<8x32xf32>,
    %c0_16 = arith.constant 0 : index
    %c0_17 = arith.constant 0 : index
    %43 = vector.load %arg8[%c0_16, %c0_17] : memref<8x32xf32, #tpu.memory_space<vmem>>, vector<8x32xf32>
    %44 = arith.mulf %34, %43 : vector<8x32xf32>
    %45 = arith.mulf %37, %29 : vector<1x8x32xf32>
    %cst_18 = arith.constant dense<0.000000e+00> : vector<8x32xf32>
    %46 = vector.multi_reduction <add>, %45, %cst_18 [0] : vector<1x8x32xf32> to vector<8x32xf32>
    %47 = arith.addf %44, %46 : vector<8x32xf32>
    %c0_19 = arith.constant 0 : index
    %c0_20 = arith.constant 0 : index
    %48 = vector.load %arg8[%c0_19, %c0_20] : memref<8x32xf32, #tpu.memory_space<vmem>>, vector<8x32xf32>
    tpu.vector_store %arg8[%c0_19, %c0_20], %47 {strides = array<i32>} : memref<8x32xf32, #tpu.memory_space<vmem>>, vector<8x32xf32>,
    %c0_21 = arith.constant 0 : index
    %c0_22 = arith.constant 0 : index
    %49 = vector.load %arg6[%c0_21, %c0_22] : memref<8x32xf32, #tpu.memory_space<vmem>>, vector<8x32xf32>
    tpu.vector_store %arg6[%c0_21, %c0_22], %32 {strides = array<i32>} : memref<8x32xf32, #tpu.memory_space<vmem>>, vector<8x32xf32>,
    %c1_i32 = arith.constant 1 : i32
    %50 = arith.cmpi eq, %arg1, %c1_i32 : i32
    %51 = arith.extui %50 : i1 to i32
    %c0_i32_23 = arith.constant 0 : i32
    %52 = arith.cmpi ne, %51, %c0_i32_23 : i32
    scf.if %52 {
      %c0_24 = arith.constant 0 : index
      %c0_25 = arith.constant 0 : index
      %53 = vector.load %arg6[%c0_24, %c0_25] : memref<8x32xf32, #tpu.memory_space<vmem>>, vector<8x32xf32>
      %cst_26 = arith.constant dense<0xFF800000> : vector<32xf32>
      %54 = vector.multi_reduction <maximumf>, %53, %cst_26 [0] : vector<8x32xf32> to vector<32xf32>
      %55 = vector.shape_cast %54 : vector<32xf32> to vector<1x32xf32>
      %c0_27 = arith.constant 0 : index
      %c0_28 = arith.constant 0 : index
      %56 = vector.load %arg6[%c0_27, %c0_28] : memref<8x32xf32, #tpu.memory_space<vmem>>, vector<8x32xf32>
      %57 = vector.broadcast %55 : vector<1x32xf32> to vector<8x32xf32>
      %58 = arith.subf %56, %57 : vector<8x32xf32>
      %59 = math.exp %58 : vector<8x32xf32>
      %c0_29 = arith.constant 0 : index
      %c0_30 = arith.constant 0 : index
      %60 = vector.load %arg7[%c0_29, %c0_30] : memref<8x32xf32, #tpu.memory_space<vmem>>, vector<8x32xf32>
      %61 = arith.mulf %59, %60 : vector<8x32xf32>
      %cst_31 = arith.constant dense<0.000000e+00> : vector<32xf32>
      %62 = vector.multi_reduction <add>, %61, %cst_31 [0] : vector<8x32xf32> to vector<32xf32>
      %63 = vector.shape_cast %62 : vector<32xf32> to vector<1x32xf32>
      %c0_32 = arith.constant 0 : index
      %c0_33 = arith.constant 0 : index
      %64 = vector.load %arg8[%c0_32, %c0_33] : memref<8x32xf32, #tpu.memory_space<vmem>>, vector<8x32xf32>
      %65 = arith.mulf %59, %64 : vector<8x32xf32>
      %cst_34 = arith.constant dense<0.000000e+00> : vector<32xf32>
      %66 = vector.multi_reduction <add>, %65, %cst_34 [0] : vector<8x32xf32> to vector<32xf32>
      %67 = vector.shape_cast %66 : vector<32xf32> to vector<1x32xf32>
      %68 = tpu.concatenate %55, %63, %67 in 0 : vector<1x32xf32>, vector<1x32xf32>, vector<1x32xf32> -> vector<3x32xf32>
      %69 = vector.shape_cast %68 : vector<3x32xf32> to vector<1x3x32xf32>
      %c0_35 = arith.constant 0 : index
      %c0_36 = arith.constant 0 : index
      %c0_37 = arith.constant 0 : index
      %70 = vector.load %arg5[%c0_35, %c0_36, %c0_37] : memref<1x3x32xf32, #tpu.memory_space<vmem>>, vector<1x3x32xf32>
      tpu.vector_store %arg5[%c0_35, %c0_36, %c0_37], %69 {strides = array<i32>} : memref<1x3x32xf32, #tpu.memory_space<vmem>>, vector<1x3x32xf32>,
    } else {
    }
    return
  }
  func.func @transform_0(%arg0: i32, %arg1: i32) -> (i32, i32) {
    %c2_i32 = arith.constant 2 : i32
    %0 = arith.muli %arg0, %c2_i32 : i32
    %1 = arith.addi %0, %arg1 : i32
    %c2_i32_0 = arith.constant 2 : i32
    %2 = arith.minsi %1, %c2_i32_0 : i32
    %c0_i32 = arith.constant 0 : i32
    %c0_i32_1 = arith.constant 0 : i32
    return %2, %c0_i32 : i32, i32
  }
  func.func @transform_1(%arg0: i32, %arg1: i32) -> (i32, i32) {
    %c0_i32 = arith.constant 0 : i32
    %c0_i32_0 = arith.constant 0 : i32
    %c0_i32_1 = arith.constant 0 : i32
    return %c0_i32, %c0_i32_0 : i32, i32
  }
  func.func @transform_2(%arg0: i32, %arg1: i32) -> (i32, i32) {
    %c0_i32 = arith.constant 0 : i32
    %c0_i32_0 = arith.constant 0 : i32
    %c0_i32_1 = arith.constant 0 : i32
    return %c0_i32, %c0_i32_0 : i32, i32
  }
  func.func @transform_3(%arg0: i32, %arg1: i32) -> (i32, i32, i32) {
    %c0_i32 = arith.constant 0 : i32
    %c0_i32_0 = arith.constant 0 : i32
    %c0_i32_1 = arith.constant 0 : i32
    return %arg0, %c0_i32, %c0_i32_0 : i32, i32, i32
  }
}

</mosaic_0001>

<llo_original>
// kernel: tpu_custom_call.1
$region0: #{tpu_custom_call.1}
  #allocation0 [shape = 'u32[]', space=smem, size = 0x4, offset = 0x4, fixed_abs, tag = 'smem constant byte address 0x4 - core index']
  #allocation1 [shape = 'u32[72,128]{1,0:T(1,128)}', space=vmem, size = 0x9000, scoped, tag = 'internal scratch']
  #allocation2 [shape = 'f32[8,32]{1,0:T(8,128)}', space=vmem, size = 0x1000, scoped, tag = 'scratch operand']
  #allocation3 [shape = 'f32[8,32]{1,0:T(8,128)}', space=vmem, size = 0x1000, scoped, tag = 'scratch operand']
  #allocation4 [shape = 'f32[8,32]{1,0:T(8,128)}', space=vmem, size = 0x1000, scoped, tag = 'scratch operand']
  %s0 = inlined_call_operand.hbm [shape: f32[22,32], index: 0, kind: input, shape index: {}]
  %s1 = inlined_call_operand.hbm [shape: bf16[32,64], index: 1, kind: input, shape index: {}]
  %s2 = inlined_call_operand.vmem [shape: f32[1,64], index: 2, kind: input, shape index: {}]
  %s3 = inlined_call_operand.vmem [shape: f32[2,3,32], index: 3, kind: output, shape index: {}]
  %s4 = sld [smem:[#allocation0]]
  $region61: #{tpu_custom_call.1} parent=0
    _
  %s6 = ssub.s32 1, %s4
  %s7 = scalar_select 0, %s6, %s4
  $region1: #{tpu_custom_call.1} parent=0
    #allocation5 [shape = 'u8[8192]{0}', space=vmem, size = 0x2000, scoped, tag = 'input window, operand 0']
    #allocation6 [shape = 's32[2]{0}', space=sflag, size = 0x8, scoped, tag = 'scoped memory for tpu_custom_call.1']
    #allocation7 [shape = 'u8[8192]{0}', space=vmem, size = 0x2000, scoped, tag = 'input window, operand 1, single buffered']
    #allocation8 [shape = 's32[1]{0}', space=sflag, size = 0x4, scoped, tag = 'scoped memory for tpu_custom_call.1']
    %8 = vsyncpa [#allocation6], 0
    %s9 = scalar_lea.sflag [#allocation6], 1
    %10 = vsyncpa %s9, 0
    %11 = vsyncpa [#allocation8], 0
    loop: start=0, step=1, limit=6
    $region2: #{tpu_custom_call.1} parent=1 // loop_pre_header
      _
    $region3: #{tpu_custom_call.1} parent=1 // loop_header
      %s13 = sphi 0, %s17
      %p14 = scmp.ge.s32.totalorder %s13, 6
      %s20 = sphi 0, %s32
      %s21 = sphi 0, %s28
      %s22 = sphi 0, %s20
      %s23 = sphi 0, %s21
      %s24 = sphi 0, %s22
      %s25 = sphi 0, %s23
      %s43 = sphi 0, %s45
      %s46 = sphi 0, %s43
      %s47 = sphi 0, %s46
      %s63 = sphi 0, %s47
      %s67 = sphi 0, %s67
      %s69 = sphi 0, %s67
      %s70 = sphi 0, %s69
      %s84 = sphi 0, %s70
      %s88 = sphi 0, %s88
      %s90 = sphi 0, %s88
      %s91 = sphi 0, %s90
      %s105 = sphi 0, %s91
      %s111 = sphi 0, %s113
      %s114 = sphi 0, %s111
      %s115 = sphi 0, %s114
      %s131 = sphi 0, %s115
    $region4: #{tpu_custom_call.1} parent=1 // loop_header_branch
      %16 = sbr.rel (%p14) target = $region8
    $region5: #{tpu_custom_call.1} parent=1 // loop_body
      %s18 = ssub.s32 %s13, 1
      %s19 = ssub.s32 %s13, 2
      %s26 = sadd.s32 1, %s21
      %p27 = scmp.ge.s32.totalorder %s26, 2
      %s28 = scalar_select %p27, 0, %s26
      %s29 = sadd.s32 1, %s20
      %s30 = scalar_select %p27, %s29, %s20
      %p31 = scmp.ge.s32.totalorder %s30, 2
      %s32 = scalar_select %p31, 0, %s30
      %s33 = smul.u32 %s20, 2
      %s34 = sadd.s32 %s33, %s21
      %p35 = scmp.lt.s32.totalorder %s34, 2
      %s36 = scalar_select %p35, %s34, 2
      %s37 = smul.u32 %s32, 2
      %s38 = sadd.s32 %s37, %s28
      %p39 = scmp.lt.s32.totalorder %s38, 2
      %s40 = scalar_select %p39, %s38, 2
      %s41 = ssub.s32 %s36, %s40
      %p42 = scmp.eq.s32.totalorder %s41, 0
      %s44 = sadd.s32 %s43, 1
      %s45 = scalar_select %p42, %s43, %s44
      %p48 = pneg %p42
      %p49 = scmp.eq.s32.totalorder %s13, 3
      %p50 = por %p48, %p49
      %p51 = scmp.ne.s32.totalorder %s43, %s46
      %p52 = scmp.eq.s32.totalorder %s13, 0
      %p53 = por %p51, %p52
      %p54 = scmp.ne.s32.totalorder %s43, %s46
      %p55 = scmp.eq.s32.totalorder %s18, 3
      %p56 = por %p54, %p55
      %p57 = scmp.ne.s32.totalorder %s46, %s47
      %p58 = scmp.eq.s32.totalorder %s18, 0
      %p59 = por %p57, %p58
      %p60 = scmp.ne.s32.totalorder %s46, %s47
      %p61 = scmp.eq.s32.totalorder %s19, 3
      %p62 = por %p60, %p61
      %p64 = scmp.ne.s32.totalorder %s47, %s63
      %p65 = scmp.eq.s32.totalorder %s19, 0
      %p66 = por %p64, %p65
      %s68 = sadd.s32 %s67, 1
      %p71 = scmp.eq.s32.totalorder %s13, 3
      %p72 = scmp.ne.s32.totalorder %s67, %s69
      %p73 = scmp.eq.s32.totalorder %s13, 0
      %p74 = por %p72, %p73
      %p75 = scmp.ne.s32.totalorder %s67, %s69
      %p76 = scmp.eq.s32.totalorder %s18, 3
      %p77 = por %p75, %p76
      %p78 = scmp.ne.s32.totalorder %s69, %s70
      %p79 = scmp.eq.s32.totalorder %s18, 0
      %p80 = por %p78, %p79
      %p81 = scmp.ne.s32.totalorder %s69, %s70
      %p82 = scmp.eq.s32.totalorder %s19, 3
      %p83 = por %p81, %p82
      %p85 = scmp.ne.s32.totalorder %s70, %s84
      %p86 = scmp.eq.s32.totalorder %s19, 0
      %p87 = por %p85, %p86
      %s89 = sadd.s32 %s88, 1
      %p92 = scmp.eq.s32.totalorder %s13, 3
      %p93 = scmp.ne.s32.totalorder %s88, %s90
      %p94 = scmp.eq.s32.totalorder %s13, 0
      %p95 = por %p93, %p94
      %p96 = scmp.ne.s32.totalorder %s88, %s90
      %p97 = scmp.eq.s32.totalorder %s18, 3
      %p98 = por %p96, %p97
      %p99 = scmp.ne.s32.totalorder %s90, %s91
      %p100 = scmp.eq.s32.totalorder %s18, 0
      %p101 = por %p99, %p100
      %p102 = scmp.ne.s32.totalorder %s90, %s91
      %p103 = scmp.eq.s32.totalorder %s19, 3
      %p104 = por %p102, %p103
      %p106 = scmp.ne.s32.totalorder %s91, %s105
      %p107 = scmp.eq.s32.totalorder %s19, 0
      %p108 = por %p106, %p107
      %s109 = ssub.s32 %s20, %s32
      %p110 = scmp.eq.s32.totalorder %s109, 0
      %s112 = sadd.s32 %s111, 1
      %s113 = scalar_select %p110, %s111, %s112
      %p116 = pneg %p110
      %p117 = scmp.eq.s32.totalorder %s13, 3
      %p118 = por %p116, %p117
      %p119 = scmp.ne.s32.totalorder %s111, %s114
      %p120 = scmp.eq.s32.totalorder %s13, 0
      %p121 = por %p119, %p120
      %p122 = scmp.ne.s32.totalorder %s111, %s114
      %p123 = scmp.eq.s32.totalorder %s18, 3
      %p124 = por %p122, %p123
      %p125 = scmp.ne.s32.totalorder %s114, %s115
      %p126 = scmp.eq.s32.totalorder %s18, 0
      %p127 = por %p125, %p126
      %p128 = scmp.ne.s32.totalorder %s114, %s115
      %p129 = scmp.eq.s32.totalorder %s19, 3
      %p130 = por %p128, %p129
      %p132 = scmp.ne.s32.totalorder %s115, %s131
      %p133 = scmp.eq.s32.totalorder %s19, 0
      %p134 = por %p132, %p133
      %p135 = scmp.le.s32.totalorder 1, %s13
      %p136 = scmp.lt.s32.totalorder %s13, 5
      %p137 = pnand %p135, %p136
      %p138 = pneg %p137
      // Predicated region
      $region9: #{tpu_custom_call.1} parent=5 // pred_check
        _
      $region10: #{tpu_custom_call.1} parent=5 // pred_check_branch
        %140 = sbr.rel (%p137) target = $region12
      $region11: #{tpu_custom_call.1} parent=5 // pred_region
        %s141 = ssub.s32 %s13, 1
        // Predicated region
        $region13: #{tpu_custom_call.1} parent=11 // pred_check
          %p142 = pneg %p80
        $region14: #{tpu_custom_call.1} parent=11 // pred_check_branch
          %144 = sbr.rel (%p142) target = $region16
        $region15: #{tpu_custom_call.1} parent=11 // pred_region
          %146 = vsyncadd [#allocation8], 0
          %s147 = sshll.u32 %s1, 4
          %s148 = int_to_ptr.hbm [resolvable:$true] %s147
          %s149 = sshll.u32 [#allocation7], 4
          %s150 = int_to_ptr.vmem [resolvable:$true] %s149
          %155 = dma.hbm_to_vmem [thread:$0]  %s148, 256, %s150, [#allocation8], 64, 64, 4
        $region16: #{tpu_custom_call.1} parent=11 // pred_fallthru
          _
        // Predicated region
        $region17: #{tpu_custom_call.1} parent=11 // pred_check
          %p156 = pneg %p101
        $region18: #{tpu_custom_call.1} parent=11 // pred_check_branch
          %158 = sbr.rel (%p156) target = $region20
        $region19: #{tpu_custom_call.1} parent=11 // pred_region
          _
        $region20: #{tpu_custom_call.1} parent=11 // pred_fallthru
          _
      $region12: #{tpu_custom_call.1} parent=5 // pred_fallthru
        _
      %p159 = scmp.lt.s32.totalorder %s13, 4
      // Predicated region
      $region21: #{tpu_custom_call.1} parent=5 // pred_check
        %p160 = pneg %p159
      $region22: #{tpu_custom_call.1} parent=5 // pred_check_branch
        %162 = sbr.rel (%p160) target = $region24
      $region23: #{tpu_custom_call.1} parent=5 // pred_region
        // Predicated region
        $region25: #{tpu_custom_call.1} parent=23 // pred_check
          %p163 = pneg %p53
        $region26: #{tpu_custom_call.1} parent=23 // pred_check_branch
          %165 = sbr.rel (%p163) target = $region28
        $region27: #{tpu_custom_call.1} parent=23 // pred_region
          %s166 = sand.u32 %s43, 1
          %s167 = scalar_lea.sflag [#allocation6], %s166
          %s168 = sand.u32 %s43, 1
          %s169 = smul.addr %s168, 8
          %s170 = scalar_lea.vmem [#allocation5], %s169
          %s171 = smul.u32 %s20, 2
          %s172 = sadd.s32 %s171, %s21
          %p173 = scmp.lt.s32.totalorder %s172, 2
          %s174 = scalar_select %p173, %s172, 2
          %176 = vsyncadd %s167, 0
          %s177 = smul.addr %s174, 8
          %s178 = scalar_lea.hbm %s0, %s177
          %s180 = sshll.u32 %s178, 4
          %s181 = int_to_ptr.hbm [resolvable:$true] %s180
          %s182 = sshll.u32 %s170, 4
          %s183 = int_to_ptr.vmem [resolvable:$true] %s182
          %185 = dma.hbm_to_vmem [thread:$0]  %s181, 128, %s183, %s167
        $region28: #{tpu_custom_call.1} parent=23 // pred_fallthru
          _
      $region24: #{tpu_custom_call.1} parent=5 // pred_fallthru
        _
      %p186 = scmp.le.s32.totalorder 1, %s13
      %p187 = scmp.lt.s32.totalorder %s13, 5
      %p188 = pnand %p186, %p187
      %p189 = pneg %p188
      // Predicated region
      $region29: #{tpu_custom_call.1} parent=5 // pred_check
        _
      $region30: #{tpu_custom_call.1} parent=5 // pred_check_branch
        %191 = sbr.rel (%p188) target = $region32
      $region31: #{tpu_custom_call.1} parent=5 // pred_region
        %s192 = ssub.s32 %s13, 1
        %s193 = sand.u32 %s46, 1
        %s194 = scalar_lea.sflag [#allocation6], %s193
        %s195 = sand.u32 %s46, 1
        %s196 = smul.addr %s195, 8
        %s197 = scalar_lea.vmem [#allocation5], %s196
        // Predicated region
        $region33: #{tpu_custom_call.1} parent=31 // pred_check
          %p198 = pneg %p59
        $region34: #{tpu_custom_call.1} parent=31 // pred_check_branch
          %200 = sbr.rel (%p198) target = $region36
        $region35: #{tpu_custom_call.1} parent=31 // pred_region
          %202 = dma.done %s194, 128
        $region36: #{tpu_custom_call.1} parent=31 // pred_fallthru
          _
        // Predicated region
        $region37: #{tpu_custom_call.1} parent=31 // pred_check
          %p203 = pneg %p80
        $region38: #{tpu_custom_call.1} parent=31 // pred_check_branch
          %205 = sbr.rel (%p203) target = $region40
        $region39: #{tpu_custom_call.1} parent=31 // pred_region
          %207 = dma.done [#allocation8], 256
        $region40: #{tpu_custom_call.1} parent=31 // pred_fallthru
          _
        %s208 = sand.u32 %s46, 1
        %s209 = scalar_lea.sflag [#allocation6], %s208
        %s210 = sand.u32 %s46, 1
        %s211 = smul.addr %s210, 8
        %s212 = scalar_lea.vmem [#allocation5], %s211
        %p213 = pneg %p59
        %p214 = pneg %p56
        %p215 = pneg %p80
        %p216 = pneg %p77
        %p217 = pneg %p101
        %p218 = pneg %p98
        %p219 = pneg %p127
        %p220 = pneg %p124
        %p221 = scmp.lt.s32.totalorder %s22, 1
        %s222 = scalar_select %p221, %s22, 1
        %s223 = smul.addr %s222, 4
        %s224 = scalar_lea.vmem %s3, %s223
        %s225 = smul.u32 %s22, 2
        %s226 = sadd.s32 %s225, %s23
        %p227 = scmp.lt.s32.totalorder %s226, 2
        %s228 = scalar_select %p227, %s226, 2
        %p229 = scmp.lt.s32.totalorder %s22, 1
        %s230 = scalar_select %p229, %s22, 1
        %s231 = smul.addr %s230, 4
        %s232 = scalar_lea.vmem %s3, %s231
        %p234 = scmp.eq.s32.totalorder %s23, 0
        // Predicated region
        $region41: #{tpu_custom_call.1} parent=31 // pred_check
          %p235 = pneg %p234
        $region42: #{tpu_custom_call.1} parent=31 // pred_check_branch
          %237 = sbr.rel (%p235) target = $region44
        $region43: #{tpu_custom_call.1} parent=31 // pred_region
          %vm238 = vcmask 261120
          %239 = vst.msk [vmem:[#allocation2] sm:$0xff] %vm238, -1e+30
          %240 = vst.msk [vmem:[#allocation3] sm:$0xff] %vm238, 0.0
          %241 = vst.msk [vmem:[#allocation4] sm:$0xff] %vm238, 0.0
        $region44: #{tpu_custom_call.1} parent=31 // pred_fallthru
          _
        %v242 = vld [vmem:[%s197] sm:$0xff]
        %v243 = vpack.c.bf16 %v242, %v242
        %v244 = vld [vmem:[#allocation7] sm:$0xf]
        %v245 = vld [vmem:[#allocation7 + $0x4] sm:$0xf]
        %v246 = vld [vmem:[#allocation7 + $0x8] sm:$0xf]
        %v247 = vld [vmem:[#allocation7 + $0xc] sm:$0xf]
        %v248 = vld [vmem:[%s2] sm:$0x1]
        %v250 = vperm.slane %v248, 0
        %v256 = vunpack.c.l.b16 %v244
        %v257 = vunpack.c.l.b16 %v245
        %v258 = vunpack.c.l.b16 %v246
        %v259 = vunpack.c.l.b16 %v247
        %v260 = vpack.c.b16 %v257, %v256
        %v261 = vpack.c.b16 %v259, %v258
        %vm264 = vcmask 261120
        %v266 = vsel %vm264, %v243, 0
        %268 = vmatpush.bf16.msra.mxu0 0
        %269 = vmatpush.bf16.msra.mxu0 0
        %270 = vmatpush.bf16.msra.mxu0 0
        %271 = vmatpush.bf16.msra.mxu0 0
        %272 = vmatpush.bf16.msra.mxu0 0
        %273 = vmatpush.bf16.msra.mxu0 0
        %274 = vmatpush.bf16.msra.mxu0 %v261
        %275 = vmatpush.bf16.msra.mxu0 %v260
        %276 = vmatmul.bf16.gmra.mxu0 %v266
        %v277 = vpop.f32.mrf.mxu0
        %v278 = vadd.f32 %v250, %v277
        %v279 = vpop.f32.mrf.mxu0
        %280 = vdwg.mxu0
        %s281 = smul.u32 %s22, 2
        %s282 = sadd.s32 %s281, %s23
        %s283 = smul.u32 %s282, 8
        %v284 = vlaneseq
        %v285 = vshrl.u32 %v284, 7
        %v286 = vstv %s283
        %v287 = vadd.s32 %v286, %v285
        %vm288 = vcmp.lt.s32.totalorder %v287, 22
        %v289 = vsel %vm288, 1, 0
        %vm290 = vcmp.eq.s32.totalorder %v289, 1
        %v291 = vsel %vm290, %v278, -1e+30
        %v292 = vsel %vm290, %v278, 0.0
        %v293 = vld [vmem:[#allocation2] sm:$0xff]
        %v294 = vmax.f32 %v293, %v291
        %v295 = vsub.f32 %v293, %v294
        %v296 = vmul.f32 %v295, 1.442695
        %v297 = vpow.pop %v296
        %v298 = vsub.f32 %v291, %v294
        %v299 = vmul.f32 %v298, 1.442695
        %v300 = vpow.pop %v299
        %v301 = vld [vmem:[#allocation3] sm:$0xff]
        %v302 = vmul.f32 %v297, %v301
        %v303 = vadd.f32 %v300, 0.0
        %v304 = vadd.f32 %v302, %v303
        %305 = vst.msk [vmem:[#allocation3] sm:$0xff] %vm264, %v304
        %v306 = vld [vmem:[#allocation4] sm:$0xff]
        %v307 = vmul.f32 %v297, %v306
        %309 = vrot.lane.b32.xlu0 %v292, 96
        %v310 = vpop.permute.xlu0 %309
        %v312 = vmul.f32 %v300, %v310
        %v313 = vadd.f32 %v312, 0.0
        %v314 = vadd.f32 %v307, %v313
        %315 = vst.msk [vmem:[#allocation4] sm:$0xff] %vm264, %v314
        %316 = vst.msk [vmem:[#allocation2] sm:$0xff] %vm264, %v294
        %p317 = scmp.eq.s32.totalorder %s23, 1
        // Predicated region
        $region45: #{tpu_custom_call.1} parent=31 // pred_check
          %p318 = pneg %p317
        $region46: #{tpu_custom_call.1} parent=31 // pred_check_branch
          %320 = sbr.rel (%p318) target = $region48
        $region47: #{tpu_custom_call.1} parent=31 // pred_region
          %v321 = vld [vmem:[#allocation2] sm:$0xff]
          %v322 = vsel %vm264, %v321, -inf
          %v323 = vrot.slane %v322, 4
          %v324 = vmax.f32 %v322, %v323
          %v325 = vrot.slane %v324, 2
          %v326 = vmax.f32 %v324, %v325
          %v327 = vrot.slane %v326, 1
          %v328 = vmax.f32 %v326, %v327
          %v329 = vsub.f32 %v321, %v328
          %v330 = vmul.f32 %v329, 1.442695
          %v331 = vpow.pop %v330
          %v332 = vld [vmem:[#allocation3] sm:$0xff]
          %v333 = vmul.f32 %v331, %v332
          %v334 = vsel %vm264, %v333, 0.0
          %v335 = vrot.slane %v334, 4
          %v336 = vadd.f32 %v334, %v335
          %v337 = vrot.slane %v336, 2
          %v338 = vadd.f32 %v336, %v337
          %v339 = vrot.slane %v338, 1
          %v340 = vadd.f32 %v338, %v339
          %v341 = vld [vmem:[#allocation4] sm:$0xff]
          %v342 = vmul.f32 %v331, %v341
          %v343 = vsel %vm264, %v342, 0.0
          %v344 = vrot.slane %v343, 4
          %v345 = vadd.f32 %v343, %v344
          %v346 = vrot.slane %v345, 2
          %v347 = vadd.f32 %v345, %v346
          %v348 = vrot.slane %v347, 1
          %v349 = vadd.f32 %v347, %v348
          %vm350 = vcmask 1040384
          %v351 = vsel %vm350, %v328, %v340
          %vm352 = vcmask 1041408
          %v353 = vsel %vm352, %v351, %v349
          %vm354 = vcmask 256000
          %355 = vst.msk [vmem:[%s232] sm:$0x7] %vm354, %v353
        $region48: #{tpu_custom_call.1} parent=31 // pred_fallthru
          _
        %p356 = scmp.lt.s32.totalorder %s22, 1
        %s357 = scalar_select %p356, %s22, 1
        %s358 = smul.addr %s357, 4
        %s359 = scalar_lea.vmem %s3, %s358
        // Predicated region
        $region49: #{tpu_custom_call.1} parent=31 // pred_check
          %p360 = pneg %p124
        $region50: #{tpu_custom_call.1} parent=31 // pred_check_branch
          %362 = sbr.rel (%p360) target = $region52
        $region51: #{tpu_custom_call.1} parent=31 // pred_region
          _
        $region52: #{tpu_custom_call.1} parent=31 // pred_fallthru
          _
      $region32: #{tpu_custom_call.1} parent=5 // pred_fallthru
        _
      %p363 = scmp.le.s32.totalorder 2, %s13
      // Predicated region
      $region53: #{tpu_custom_call.1} parent=5 // pred_check
        %p364 = pneg %p363
      $region54: #{tpu_custom_call.1} parent=5 // pred_check_branch
        %366 = sbr.rel (%p364) target = $region56
      $region55: #{tpu_custom_call.1} parent=5 // pred_region
        %s367 = ssub.s32 %s13, 2
        // Predicated region
        $region57: #{tpu_custom_call.1} parent=55 // pred_check
          %p368 = pneg %p130
        $region58: #{tpu_custom_call.1} parent=55 // pred_check_branch
          %370 = sbr.rel (%p368) target = $region60
        $region59: #{tpu_custom_call.1} parent=55 // pred_region
          %p371 = scmp.lt.s32.totalorder %s24, 1
          %s372 = scalar_select %p371, %s24, 1
          %s373 = smul.addr %s372, 4
          %s374 = scalar_lea.vmem %s3, %s373
        $region60: #{tpu_custom_call.1} parent=55 // pred_fallthru
          _
      $region56: #{tpu_custom_call.1} parent=5 // pred_fallthru
        _
    $region6: #{tpu_custom_call.1} parent=1 // loop_footer
      %s17 = sadd.s32 1, %s13
    $region7: #{tpu_custom_call.1} parent=1 // loop_footer_branch
      %12 = sbr.rel target = $region3
    $region8: #{tpu_custom_call.1} parent=1 // loop_exit
      _
    %375 = vsyncpa [#allocation6], 1
    %s376 = scalar_lea.sflag [#allocation6], 1
    %377 = vsyncpa %s376, 1
    %378 = vsyncpa [#allocation8], 1

</llo_original>
